<compile_context>
chip_gen: v6e
topology: v6e:2x2x1
jax: 0.10.0
libtpu: 0.0.40
codegen_flags: <defaults>
</compile_context>

<pallas_src>
import functools
import math

import jax
import jax.numpy as jnp
from jax.experimental import pallas as pl
from jax.experimental.pallas import tpu as pltpu


_SQRT_HALF = 0.7071067811865476
_EPS = 1e-5


# ----------------------------------------------------------------------------
# math helpers
# ----------------------------------------------------------------------------

def _erf_approx(x):
    # Abramowitz & Stegun 7.1.26, |error| <= 1.5e-7.  Built only from
    # mul/add/exp/where so it is guaranteed to lower in Mosaic (no erf prim).
    a1, a2, a3, a4, a5 = (0.254829592, -0.284496736, 1.421413741,
                          -1.453152027, 1.061405429)
    p = 0.3275911
    ax = jnp.abs(x)
    t = 1.0 / (1.0 + p * ax)
    poly = ((((a5 * t + a4) * t + a3) * t + a2) * t + a1) * t
    y = 1.0 - poly * jnp.exp(-ax * ax)
    return jnp.where(x < 0, -y, y)


def _gelu_exact(x):
    # x * 0.5 * (1 + erf(x / sqrt(2)))  — matches the torch GELU in the spec.
    return x * 0.5 * (1.0 + _erf_approx(x * _SQRT_HALF))


# ----------------------------------------------------------------------------
# generation-aware tiling helpers
# ----------------------------------------------------------------------------

def _hw_params():
    """Returns (vmem_capacity_bytes, n_tensorcores_guess, target_block_bytes)."""
    vmem_cap = 128 * 1024 * 1024
    try:
        info = pltpu.get_tpu_info()
        for name in ("vmem_capacity_bytes", "vmem_bytes", "vmem_size_bytes"):
            cap = getattr(info, name, None)
            if cap:
                vmem_cap = int(cap)
                break
    except Exception:
        pass
    # Heuristic: 64 MiB VMEM parts (v7x-style) have 2 TensorCores; 128 MiB
    # parts (v5e/v6e) have 1.  Only megacore parts benefit from >=2 grid steps.
    n_cores = 2 if vmem_cap <= 64 * 1024 * 1024 else 1
    target_block = 4 * 1024 * 1024 if n_cores == 2 else 8 * 1024 * 1024
    return vmem_cap, n_cores, target_block


def _choose_row_tile(rows, row_bytes, target_block_bytes, min_steps):
    """Biggest multiple-of-8 divisor of `rows` whose block stays under the VMEM
    byte budget, while keeping >= min_steps grid steps (megacore only)."""
    cands = [t for t in range(8, rows + 1, 8) if rows % t == 0]
    if not cands:
        return rows
    fitting = [t for t in cands if t * row_bytes <= target_block_bytes]
    tile = max(fitting) if fitting else min(cands)
    while rows // tile < min_steps:
        smaller = [t for t in cands if t < tile]
        if not smaller:
            break
        tile = max(smaller)
    return tile


def _choose_col_tile(cols, cap):
    """Largest divisor of `cols` that is a multiple of 128 and <= cap; falls
    back to the full dim (required when cols < 128 — BlockSpec lane rule)."""
    cands = [c for c in range(128, min(cols, cap) + 1, 128) if cols % c == 0]
    return max(cands) if cands else cols


def _choose_seq_tile(s, cap):
    cands = [t for t in range(8, min(s, cap) + 1, 8) if s % t == 0]
    return max(cands) if cands else s


def _vmem_limit(block_bytes, vmem_cap):
    """Scoped-VMEM request derived from the actual block sizes (double-buffered
    blocks + headroom), clamped below the physical capacity."""
    need = 3 * int(block_bytes) + (8 << 20)
    return int(max(32 << 20, min(need, int(0.9 * vmem_cap))))


# ----------------------------------------------------------------------------
# kernels
# ----------------------------------------------------------------------------

def _rmsnorm_qkv_kernel(x_ref, g_ref, w_ref, o_ref, *, eps):
    # out[:, col_block] = (RMSnorm(x) * g) @ Wqkv[:, col_block]
    x = x_ref[...].astype(jnp.float32)                       # (tm, D)
    inv = jax.lax.rsqrt(jnp.mean(x * x, axis=-1, keepdims=True) + eps)  # EUP
    h = (x * inv * g_ref[...]).astype(jnp.bfloat16)          # bf16 dot operand
    o_ref[...] = jnp.dot(h, w_ref[...],
                         preferred_element_type=jnp.float32).astype(o_ref.dtype)


def _flash_attention_kernel(q_ref, k_ref, v_ref, o_ref,
                            m_ref, l_ref, acc_ref, *, scale, num_heads):
    # One (batch, q-tile, kv-tile) step, all heads batched.
    # q_ref: (tq, H, dk)   k_ref/v_ref: (tkv, H, dk)   o_ref: (tq, D)
    H = num_heads
    tq = q_ref.shape[0]
    tkv = k_ref.shape[0]
    dk = q_ref.shape[-1]
    qi = pl.program_id(1)
    ki = pl.program_id(2)

    @pl.when(ki == 0)
    def _init():
        m_ref[...] = jnp.full(m_ref.shape, -jnp.inf, jnp.float32)
        l_ref[...] = jnp.zeros(l_ref.shape, jnp.float32)
        acc_ref[...] = jnp.zeros(acc_ref.shape, jnp.float32)

    # Skip kv blocks that lie entirely above the causal diagonal.
    @pl.when(ki * tkv <= qi * tq + (tq - 1))
    def _compute():
        q_all = q_ref[...]                                   # (tq, H, dk) bf16
        k_all = k_ref[...]                                   # (tkv, H, dk)
        v_all = v_ref[...]
        # head-major stacking in VMEM (no HBM transpose anywhere)
        q = jnp.stack([q_all[:, h, :] for h in range(H)], axis=0)   # (H, tq, dk)
        k = jnp.stack([k_all[:, h, :] for h in range(H)], axis=0)   # (H, tkv, dk)
        v = jnp.stack([v_all[:, h, :] for h in range(H)], axis=0)

        s = jnp.einsum('hqd,hkd->hqk', q, k,
                       preferred_element_type=jnp.float32) * scale  # (H, tq, tkv)
        row = qi * tq + jax.lax.broadcasted_iota(jnp.int32, s.shape, 1)
        col = ki * tkv + jax.lax.broadcasted_iota(jnp.int32, s.shape, 2)
        s = jnp.where(col > row, -jnp.inf, s)                # strict upper-tri mask

        m_prev = m_ref[...]
        m_new = jnp.maximum(m_prev, jnp.max(s, axis=-1, keepdims=True))
        alpha = jnp.exp(m_prev - m_new)
        p = jnp.exp(s - m_new)
        l_ref[...] = alpha * l_ref[...] + jnp.sum(p, axis=-1, keepdims=True)
        acc_ref[...] = alpha * acc_ref[...] + jnp.einsum(
            'hqk,hkd->hqd', p.astype(v.dtype), v,
            preferred_element_type=jnp.float32)
        m_ref[...] = m_new

    @pl.when(ki == pl.num_programs(2) - 1)
    def _finalize():
        for h in range(H):
            inv = pl.reciprocal(l_ref[h], approx=True)       # EUP, not VALU divide
            o_ref[:, h * dk:(h + 1) * dk] = (acc_ref[h] * inv).astype(o_ref.dtype)


def _proj_ffn_residual_kernel(c_ref, wo_ref, x_ref, g_ref, w1_ref, w2_ref,
                              o_ref, xattn_ref, h2_ref, acc_ref, *, eps):
    # Fused:  x_attn = ctx @ Wo + x
    #         out    = x_attn + W2-accum( gelu( RMSnorm(x_attn)*g @ W1_chunk ) )
    # F (hidden) dimension is tiled along grid axis 1 with a VMEM accumulator.
    j = pl.program_id(1)

    @pl.when(j == 0)
    def _init():
        xa = jnp.dot(c_ref[...], wo_ref[...],
                     preferred_element_type=jnp.float32)
        xa = xa + x_ref[...].astype(jnp.float32)
        xattn_ref[...] = xa
        inv = jax.lax.rsqrt(jnp.mean(xa * xa, axis=-1, keepdims=True) + eps)
        h2_ref[...] = (xa * inv * g_ref[...]).astype(jnp.bfloat16)
        acc_ref[...] = jnp.zeros(acc_ref.shape, jnp.float32)

    a = jnp.dot(h2_ref[...], w1_ref[...], preferred_element_type=jnp.float32)
    a = _gelu_exact(a)
    acc_ref[...] += jnp.dot(a.astype(jnp.bfloat16), w2_ref[...],
                            preferred_element_type=jnp.float32)

    @pl.when(j == pl.num_programs(1) - 1)
    def _finalize():
        o_ref[...] = (xattn_ref[...] + acc_ref[...]).astype(o_ref.dtype)


# ----------------------------------------------------------------------------
# wrapper: parameter prep + full transformer block forward
# ----------------------------------------------------------------------------

def prepare_params(params):
    """Hoists per-call work out of the forward pass: QKV concat + bf16 weight
    casts are done once here (review item)."""
    D = params["wq"].shape[0]
    p = dict(params)
    p["wqkv_bf16"] = jnp.concatenate(
        [params["wq"], params["wk"], params["wv"]], axis=1).astype(jnp.bfloat16)
    p["wo_bf16"] = params["wo"].astype(jnp.bfloat16)
    p["w1_bf16"] = params["w1"].astype(jnp.bfloat16)
    p["w2_bf16"] = params["w2"].astype(jnp.bfloat16)
    p["ln1_2d"] = params["ln1"].reshape(1, D).astype(jnp.float32)
    p["ln2_2d"] = params["ln2"].reshape(1, D).astype(jnp.float32)
    return p


def transformer_block_forward(x, params):
    B, S, D = x.shape
    H = int(params["num_heads"])
    dk = D // H
    F = params["w1_bf16"].shape[1]
    R = B * S

    vmem_cap, n_cores, target_block = _hw_params()
    min_steps = 2 if n_cores >= 2 else 1

    x2d = x.reshape(R, D)
    ln1, ln2 = params["ln1_2d"], params["ln2_2d"]
    wqkv, wo = params["wqkv_bf16"], params["wo_bf16"]
    w1, w2 = params["w1_bf16"], params["w2_bf16"]

    # ---- K1: fused RMSnorm(ln1) + QKV projection (row + column tiled) -----
    tc1 = _choose_col_tile(3 * D, 1024)
    tm1 = _choose_row_tile(R, 4 * D + 2 * D + 4 * tc1, target_block, min_steps)
    k1_bytes = tm1 * D * 4 + D * tc1 * 2 + tm1 * tc1 * 4 + tm1 * D * 4
    qkv = pl.pallas_call(
        functools.partial(_rmsnorm_qkv_kernel, eps=_EPS),
        out_shape=jax.ShapeDtypeStruct((R, 3 * D), jnp.bfloat16),
        grid_spec=pltpu.PrefetchScalarGridSpec(
            num_scalar_prefetch=0,
            grid=(R // tm1, (3 * D) // tc1),
            in_specs=[
                pl.BlockSpec((tm1, D), lambda i, j: (i, 0)),
                pl.BlockSpec((1, D), lambda i, j: (0, 0)),
                pl.BlockSpec((D, tc1), lambda i, j: (0, j)),
            ],
            out_specs=pl.BlockSpec((tm1, tc1), lambda i, j: (i, j)),
        ),
        compiler_params=pltpu.CompilerParams(
            dimension_semantics=("parallel", "arbitrary"),
            vmem_limit_bytes=_vmem_limit(k1_bytes, vmem_cap)),
    )(x2d, ln1, wqkv)

    # ---- K2: flash-style causal attention, heads batched per step ---------
    # Free reshape only (no HBM transpose): col = slot*D + h*dk + d.
    qkv5 = qkv.reshape(B, S, 3, H, dk)
    tq = _choose_seq_tile(S, 128)
    tkv = _choose_seq_tile(S, 256)
    scale = 1.0 / math.sqrt(dk)
    k2_bytes = ((tq + 2 * tkv) * H * dk * 2 + tq * D * 2
                + H * tq * (dk + 2) * 4 + 2 * H * tq * tkv * 4)
    ctx = pl.pallas_call(
        functools.partial(_flash_attention_kernel, scale=scale, num_heads=H),
        out_shape=jax.ShapeDtypeStruct((B, S, D), jnp.bfloat16),
        grid_spec=pltpu.PrefetchScalarGridSpec(
            num_scalar_prefetch=0,
            grid=(B, S // tq, S // tkv),
            in_specs=[
                # same qkv array passed three times; the "3" axis selects Q/K/V
                pl.BlockSpec((None, tq, None, H, dk),
                             lambda b, qi, ki: (b, qi, 0, 0, 0)),
                pl.BlockSpec((None, tkv, None, H, dk),
                             lambda b, qi, ki: (b, ki, 1, 0, 0)),
                pl.BlockSpec((None, tkv, None, H, dk),
                             lambda b, qi, ki: (b, ki, 2, 0, 0)),
            ],
            out_specs=pl.BlockSpec((None, tq, D), lambda b, qi, ki: (b, qi, 0)),
            scratch_shapes=[
                pltpu.VMEM((H, tq, 1), jnp.float32),    # running max m
                pltpu.VMEM((H, tq, 1), jnp.float32),    # running denom l
                pltpu.VMEM((H, tq, dk), jnp.float32),   # output accumulator
            ],
        ),
        compiler_params=pltpu.CompilerParams(
            dimension_semantics=("parallel", "parallel", "arbitrary"),
            vmem_limit_bytes=_vmem_limit(k2_bytes, vmem_cap)),
    )(qkv5, qkv5, qkv5)

    ctx2d = ctx.reshape(R, D)   # free reshape (col = h*dk + d), no transpose

    # ---- K3: fused Wo-proj + residual + RMSnorm(ln2) + FFN (F-tiled) + res -
    fc = _choose_col_tile(F, 512)
    tm3 = _choose_row_tile(R, 2 * D + 4 * D + 10 * D + 4 * fc,
                           target_block, min_steps)
    k3_bytes = (tm3 * D * 2 + D * D * 2 + tm3 * D * 4 + D * 4
                + D * fc * 2 + fc * D * 2 + tm3 * D * 4
                + tm3 * D * 10 + tm3 * fc * 4)
    out2d = pl.pallas_call(
        functools.partial(_proj_ffn_residual_kernel, eps=_EPS),
        out_shape=jax.ShapeDtypeStruct((R, D), jnp.float32),
        grid_spec=pltpu.PrefetchScalarGridSpec(
            num_scalar_prefetch=0,
            grid=(R // tm3, F // fc),
            in_specs=[
                pl.BlockSpec((tm3, D), lambda i, j: (i, 0)),   # ctx (bf16)
                pl.BlockSpec((D, D), lambda i, j: (0, 0)),     # Wo (bf16)
                pl.BlockSpec((tm3, D), lambda i, j: (i, 0)),   # x residual (f32)
                pl.BlockSpec((1, D), lambda i, j: (0, 0)),     # ln2 gain
                pl.BlockSpec((D, fc), lambda i, j: (0, j)),    # W1 col block
                pl.BlockSpec((fc, D), lambda i, j: (j, 0)),    # W2 row block
            ],
            out_specs=pl.BlockSpec((tm3, D), lambda i, j: (i, 0)),
            scratch_shapes=[
                pltpu.VMEM((tm3, D), jnp.float32),    # x_attn
                pltpu.VMEM((tm3, D), jnp.bfloat16),   # RMSnorm(x_attn)*g
                pltpu.VMEM((tm3, D), jnp.float32),    # FFN accumulator
            ],
        ),
        compiler_params=pltpu.CompilerParams(
            dimension_semantics=("parallel", "arbitrary"),
            vmem_limit_bytes=_vmem_limit(k3_bytes, vmem_cap)),
    )(ctx2d, wo, x2d, ln2, w1, w2)

    return out2d.reshape(B, S, D)


# ----------------------------------------------------------------------------
# pure-JAX reference (mirrors the PyTorch module, dropout p = 0)
# ----------------------------------------------------------------------------

def reference_transformer_block(x, params):
    B, S, D = x.shape
    H = params["num_heads"]
    dk = D // H
    hi = jax.lax.Precision.HIGHEST

    def rmsnorm(v, w):
        return v / jnp.sqrt(jnp.mean(v * v, axis=-1, keepdims=True) + _EPS) * w

    def gelu(v):
        return v * 0.5 * (1.0 + jax.scipy.special.erf(v / jnp.sqrt(2.0)))

    h = rmsnorm(x, params["ln1"])
    q = jnp.matmul(h, params["wq"], precision=hi)
    k = jnp.matmul(h, params["wk"], precision=hi)
    v = jnp.matmul(h, params["wv"], precision=hi)
    q = q.reshape(B, S, H, dk).transpose(0, 2, 1, 3)
    k = k.reshape(B, S, H, dk).transpose(0, 2, 1, 3)
    v = v.reshape(B, S, H, dk).transpose(0, 2, 1, 3)

    scores = jnp.matmul(q, k.transpose(0, 1, 3, 2), precision=hi) / math.sqrt(dk)
    mask = jnp.triu(jnp.ones((S, S), dtype=bool), k=1)
    scores = jnp.where(mask, -jnp.inf, scores)
    scores = scores - jnp.max(scores, axis=-1, keepdims=True)
    w_attn = jnp.exp(scores)
    w_attn = w_attn / jnp.sum(w_attn, axis=-1, keepdims=True)

    ctx = jnp.matmul(w_attn, v, precision=hi)
    ctx = ctx.transpose(0, 2, 1, 3).reshape(B, S, D)
    x = x + jnp.matmul(ctx, params["wo"], precision=hi)

    h2 = rmsnorm(x, params["ln2"])
    ffn = jnp.matmul(gelu(jnp.matmul(h2, params["w1"], precision=hi)),
                     params["w2"], precision=hi)
    return x + ffn


# ----------------------------------------------------------------------------
# main
# ----------------------------------------------------------------------------

if __name__ == "__main__":
    key = jax.random.PRNGKey(0)
    B, S, D, H, F = 2, 16, 32, 4, 64   # batch, seq, d_model, heads, d_ff
    ks = jax.random.split(key, 10)

    def w(k_, shape):
        return (jax.random.normal(k_, shape, jnp.float32)
                / jnp.sqrt(jnp.float32(shape[0])))

    x = jax.random.normal(ks[0], (B, S, D), jnp.float32)
    params = {
        "num_heads": H,
        "ln1": 1.0 + 0.1 * jax.random.normal(ks[1], (D,), jnp.float32),
        "ln2": 1.0 + 0.1 * jax.random.normal(ks[2], (D,), jnp.float32),
        "wq": w(ks[3], (D, D)),
        "wk": w(ks[4], (D, D)),
        "wv": w(ks[5], (D, D)),
        "wo": w(ks[6], (D, D)),
        "w1": w(ks[7], (D, F)),
        "w2": w(ks[8], (F, D)),
    }

    prepped = prepare_params(params)
    out = jax.block_until_ready(transformer_block_forward(x, prepped))
    ref = reference_transformer_block(x, params)

    assert out.shape == x.shape
    assert out.dtype == x.dtype
    # Tolerance covers bf16 MXU operands (f32 accumulation), the approx EUP
    # reciprocal in the softmax normalize, and the erf polynomial (1.5e-7).
    max_err = float(jnp.max(jnp.abs(out - ref)))
    assert jnp.allclose(out, ref, atol=4e-2, rtol=4e-2), f"max abs err {max_err}"

    print("KERNEL_OK")
</pallas_src>

<mosaic_0001>
module attributes {stable_mosaic.version = 11 : i64} {
  func.func @_rmsnorm_qkv_kernel(%arg0: i32, %arg1: i32, %arg2: memref<32x32xf32, #tpu.memory_space<vmem>>, %arg3: memref<1x32xf32, #tpu.memory_space<vmem>>, %arg4: memref<32x96xbf16, #tpu.memory_space<vmem>>, %arg5: memref<32x96xbf16, #tpu.memory_space<vmem>>) attributes {dimension_semantics = [#tpu.dimension_semantics<parallel>, #tpu.dimension_semantics<arbitrary>], iteration_bounds = array<i64: 1, 1>, scalar_prefetch = 0 : i64, scratch_operands = 0 : i64, tpu.core_type = #tpu.core_type<tc>, window_params = [{transform_indices = @transform_0, window_bounds = array<i64: 32, 32>}, {pipeline_mode = #tpu.pipeline_mode<synchronous>, transform_indices = @transform_1, window_bounds = array<i64: 1, 32>}, {transform_indices = @transform_2, window_bounds = array<i64: 32, 96>}, {transform_indices = @transform_3, window_bounds = array<i64: 32, 96>}]} {
    %c0 = arith.constant 0 : index
    %c0_0 = arith.constant 0 : index
    %0 = vector.load %arg2[%c0, %c0_0] : memref<32x32xf32, #tpu.memory_space<vmem>>, vector<32x32xf32>
    %1 = arith.mulf %0, %0 : vector<32x32xf32>
    %cst = arith.constant dense<0.000000e+00> : vector<32xf32>
    %2 = vector.multi_reduction <add>, %1, %cst [1] : vector<32x32xf32> to vector<32xf32>
    %3 = vector.shape_cast %2 : vector<32xf32> to vector<32x1xf32>
    %cst_1 = arith.constant 3.200000e+01 : f32
    %4 = vector.broadcast %cst_1 : f32 to vector<32x1xf32>
    %5 = arith.divf %3, %4 : vector<32x1xf32>
    %cst_2 = arith.constant 9.99999974E-6 : f32
    %6 = vector.broadcast %cst_2 : f32 to vector<32x1xf32>
    %7 = arith.addf %5, %6 : vector<32x1xf32>
    %8 = math.rsqrt %7 : vector<32x1xf32>
    %9 = vector.broadcast %8 : vector<32x1xf32> to vector<32x32xf32>
    %10 = arith.mulf %0, %9 : vector<32x32xf32>
    %c0_3 = arith.constant 0 : index
    %c0_4 = arith.constant 0 : index
    %11 = vector.load %arg3[%c0_3, %c0_4] : memref<1x32xf32, #tpu.memory_space<vmem>>, vector<1x32xf32>
    %12 = vector.broadcast %11 : vector<1x32xf32> to vector<32x32xf32>
    %13 = arith.mulf %10, %12 : vector<32x32xf32>
    %14 = arith.truncf %13 : vector<32x32xf32> to vector<32x32xbf16>
    %c0_5 = arith.constant 0 : index
    %c0_6 = arith.constant 0 : index
    %15 = vector.load %arg4[%c0_5, %c0_6] : memref<32x96xbf16, #tpu.memory_space<vmem>>, vector<32x96xbf16>
    %cst_7 = arith.constant dense<0.000000e+00> : vector<32x96xf32>
    %16 = tpu.matmul %14, %15, %cst_7 {dimension_numbers = #tpu.dot_dimension_numbers<[1], [0], [0], [1], [0, 0, 1, 1], [], []>} : vector<32x32xbf16>, vector<32x96xbf16>, vector<32x96xf32> -> vector<32x96xf32>
    %17 = arith.truncf %16 : vector<32x96xf32> to vector<32x96xbf16>
    %c0_8 = arith.constant 0 : index
    %c0_9 = arith.constant 0 : index
    %18 = vector.load %arg5[%c0_8, %c0_9] : memref<32x96xbf16, #tpu.memory_space<vmem>>, vector<32x96xbf16>
    tpu.vector_store %arg5[%c0_8, %c0_9], %17 {strides = array<i32>} : memref<32x96xbf16, #tpu.memory_space<vmem>>, vector<32x96xbf16>,
    return
  }
  func.func @transform_0(%arg0: i32, %arg1: i32) -> (i32, i32) {
    %c0_i32 = arith.constant 0 : i32
    %c0_i32_0 = arith.constant 0 : i32
    return %arg0, %c0_i32 : i32, i32
  }
  func.func @transform_1(%arg0: i32, %arg1: i32) -> (i32, i32) {
    %c0_i32 = arith.constant 0 : i32
    %c0_i32_0 = arith.constant 0 : i32
    %c0_i32_1 = arith.constant 0 : i32
    return %c0_i32, %c0_i32_0 : i32, i32
  }
  func.func @transform_2(%arg0: i32, %arg1: i32) -> (i32, i32) {
    %c0_i32 = arith.constant 0 : i32
    %c0_i32_0 = arith.constant 0 : i32
    return %c0_i32, %arg1 : i32, i32
  }
  func.func @transform_3(%arg0: i32, %arg1: i32) -> (i32, i32) {
    %c0_i32 = arith.constant 0 : i32
    return %arg0, %arg1 : i32, i32
  }
}

</mosaic_0001>

<llo_original>
// kernel: tpu_custom_call.1
$region0: #{tpu_custom_call.1}
  #allocation0 [shape = 'u32[]', space=smem, size = 0x4, offset = 0x4, fixed_abs, tag = 'smem constant byte address 0x4 - core index']
  #allocation1 [shape = 'u32[144,128]{1,0:T(1,128)}', space=vmem, size = 0x12000, scoped, tag = 'internal scratch']
  %s0 = inlined_call_operand.hbm [shape: f32[32,32], index: 0, kind: input, shape index: {}]
  %s1 = inlined_call_operand.vmem [shape: f32[1,32], index: 1, kind: input, shape index: {}]
  %s2 = inlined_call_operand.hbm [shape: bf16[32,96], index: 2, kind: input, shape index: {}]
  %s3 = inlined_call_operand.hbm [shape: bf16[32,96], index: 3, kind: output, shape index: {}]
  %s4 = sld [smem:[#allocation0]]
  $region30: #{tpu_custom_call.1} parent=0
    _
  %s6 = ssub.s32 1, %s4
  %s7 = scalar_select 0, %s6, %s4
  $region1: #{tpu_custom_call.1} parent=0
    #allocation2 [shape = 'u8[16384]{0}', space=vmem, size = 0x4000, scoped, tag = 'input window, operand 0, single buffered']
    #allocation3 [shape = 's32[1]{0}', space=sflag, size = 0x4, scoped, tag = 'scoped memory for tpu_custom_call.1']
    #allocation4 [shape = 's32[1]{0}', space=sflag, size = 0x4, scoped, tag = 'scoped memory for tpu_custom_call.1']
    #allocation5 [shape = 'u8[8192]{0}', space=vmem, size = 0x2000, scoped, tag = 'input window, operand 2, single buffered']
    #allocation6 [shape = 's32[1]{0}', space=sflag, size = 0x4, scoped, tag = 'scoped memory for tpu_custom_call.1']
    #allocation7 [shape = 'u8[8192]{0}', space=vmem, size = 0x2000, scoped, tag = 'output window, operand 0, single buffered']
    %8 = vsyncpa [#allocation3], 0
    %9 = vsyncpa [#allocation6], 0
    %10 = vsyncpa [#allocation4], 0
    // Predicated region
    $region2: #{tpu_custom_call.1} parent=1 // pred_check
      _
    $region3: #{tpu_custom_call.1} parent=1 // pred_check_branch
      %12 = sbr.rel (0) target = $region5
    $region4: #{tpu_custom_call.1} parent=1 // pred_region
      %s14 = ssub.s32 512, 512
      %15 = vsyncadd [#allocation3], %s14
      %s16 = sshll.u32 [#allocation2], 4
      %s17 = int_to_ptr.vmem [resolvable:$true] %s16
      %22 = dma.hbm_to_vmem [thread:$0]  %s0, 512, %s17, [#allocation3], 128, 128, 8
    $region5: #{tpu_custom_call.1} parent=1 // pred_fallthru
      _
    // Predicated region
    $region6: #{tpu_custom_call.1} parent=1 // pred_check
      _
    $region7: #{tpu_custom_call.1} parent=1 // pred_check_branch
      %24 = sbr.rel (0) target = $region9
    $region8: #{tpu_custom_call.1} parent=1 // pred_region
      _
    $region9: #{tpu_custom_call.1} parent=1 // pred_fallthru
      _
    // Predicated region
    $region10: #{tpu_custom_call.1} parent=1 // pred_check
      _
    $region11: #{tpu_custom_call.1} parent=1 // pred_check_branch
      %26 = sbr.rel (0) target = $region13
    $region12: #{tpu_custom_call.1} parent=1 // pred_region
      %s28 = ssub.s32 256, 256
      %29 = vsyncadd [#allocation6], %s28
      %s30 = sshll.u32 [#allocation5], 4
      %s31 = int_to_ptr.vmem [resolvable:$true] %s30
      %36 = dma.hbm_to_vmem [thread:$0]  %s2, 256, %s31, [#allocation6], 64, 64, 4
    $region13: #{tpu_custom_call.1} parent=1 // pred_fallthru
      _
    // Predicated region
    $region14: #{tpu_custom_call.1} parent=1 // pred_check
      _
    $region15: #{tpu_custom_call.1} parent=1 // pred_check_branch
      %38 = sbr.rel (0) target = $region17
    $region16: #{tpu_custom_call.1} parent=1 // pred_region
      %39 = dma.done [#allocation3], 512
    $region17: #{tpu_custom_call.1} parent=1 // pred_fallthru
      _
    // Predicated region
    $region18: #{tpu_custom_call.1} parent=1 // pred_check
      _
    $region19: #{tpu_custom_call.1} parent=1 // pred_check_branch
      %41 = sbr.rel (0) target = $region21
    $region20: #{tpu_custom_call.1} parent=1 // pred_region
      %42 = dma.done [#allocation6], 256
    $region21: #{tpu_custom_call.1} parent=1 // pred_fallthru
      _
    %v44 = vld [vmem:[#allocation2] sm:$0xff]
    %v45 = vld [vmem:[#allocation2 + $0x8] sm:$0xff]
    %v46 = vld [vmem:[#allocation2 + $0x10] sm:$0xff]
    %v47 = vld [vmem:[#allocation2 + $0x18] sm:$0xff]
    %v48 = vmul.f32 %v44, %v44
    %v49 = vmul.f32 %v45, %v45
    %v50 = vmul.f32 %v46, %v46
    %v51 = vmul.f32 %v47, %v47
    %vm52 = vcmask 261120
    %v53 = vsel %vm52, %v48, 0.0
    %54 = vadd.xlane.f32.xlu0 %v53
    %v55 = vpop.xlane.xlu0 %54
    %v56 = vsel %vm52, %v49, 0.0
    %57 = vadd.xlane.f32.xlu0 %v56
    %v58 = vpop.xlane.xlu0 %57
    %v59 = vsel %vm52, %v50, 0.0
    %60 = vadd.xlane.f32.xlu0 %v59
    %v61 = vpop.xlane.xlu0 %60
    %v62 = vsel %vm52, %v51, 0.0
    %63 = vadd.xlane.f32.xlu0 %v62
    %v64 = vpop.xlane.xlu0 %63
    %v65 = vrcp.pop 32.0
    %v66 = vmul.f32 %v55, %v65
    %v67 = vmul.f32 %v58, %v65
    %v68 = vmul.f32 %v61, %v65
    %v69 = vmul.f32 %v64, %v65
    %v70 = vadd.f32 %v66, 1e-05
    %v71 = vadd.f32 %v67, 1e-05
    %v72 = vadd.f32 %v68, 1e-05
    %v73 = vadd.f32 %v69, 1e-05
    %v74 = vrsqrt.pop %v70
    %v75 = vrsqrt.pop %v71
    %v76 = vrsqrt.pop %v72
    %v77 = vrsqrt.pop %v73
    %v78 = vmul.f32 %v44, %v74
    %v79 = vmul.f32 %v45, %v75
    %v80 = vmul.f32 %v46, %v76
    %v81 = vmul.f32 %v47, %v77
    %v82 = vld [vmem:[%s1] sm:$0x1]
    %v84 = vlaneseq
    %v85 = vshrl.u32 %v84, 7
    %v86 = vsub.s32 0, %v85
    %v87 = vrot.slane %v82, %v86
    %v89 = vmul.f32 %v78, %v87
    %v90 = vmul.f32 %v79, %v87
    %v91 = vmul.f32 %v80, %v87
    %v92 = vmul.f32 %v81, %v87
    %v93 = vpack.c.bf16 %v90, %v89
    %v94 = vpack.c.bf16 %v92, %v91
    %v95 = vld [vmem:[#allocation5] sm:$0xf]
    %v96 = vld [vmem:[#allocation5 + $0x4] sm:$0xf]
    %v97 = vld [vmem:[#allocation5 + $0x8] sm:$0xf]
    %v98 = vld [vmem:[#allocation5 + $0xc] sm:$0xf]
    %v103 = vunpack.c.l.b16 %v95
    %v104 = vunpack.c.l.b16 %v96
    %v105 = vunpack.c.l.b16 %v97
    %v106 = vunpack.c.l.b16 %v98
    %v107 = vpack.c.b16 %v104, %v103
    %v108 = vpack.c.b16 %v106, %v105
    %v112 = vsel %vm52, %v93, 0
    %v115 = vsel %vm52, %v94, 0
    %117 = vmatprep.subr.bf16.mxu0 0
    %118 = vmatpush1.bf16.msra.mxu0 0
    %119 = vmatprep.subr.bf16.mxu0 0
    %120 = vmatpush1.bf16.msra.mxu0 0
    %121 = vmatprep.subr.bf16.mxu0 0
    %122 = vmatpush1.bf16.msra.mxu0 0
    %123 = vmatprep.subr.bf16.mxu0 0
    %124 = vmatpush1.bf16.msra.mxu0 0
    %125 = vmatprep.subr.bf16.mxu0 0
    %126 = vmatpush1.bf16.msra.mxu0 0
    %127 = vmatprep.subr.bf16.mxu0 0
    %128 = vmatpush1.bf16.msra.mxu0 0
    %129 = vmatprep.subr.bf16.mxu0 0
    %130 = vmatpush1.bf16.msra.mxu0 %v108
    %131 = vmatprep.subr.bf16.mxu0 0
    %132 = vmatpush1.bf16.msra.mxu0 %v107
    %133 = vmatprep.subr.bf16.mxu0 0
    %134 = vmatpush2.bf16.msra.mxu0 0
    %135 = vmatprep.subr.bf16.mxu0 0
    %136 = vmatpush2.bf16.msra.mxu0 0
    %137 = vmatprep.subr.bf16.mxu0 0
    %138 = vmatpush2.bf16.msra.mxu0 0
    %139 = vmatprep.subr.bf16.mxu0 0
    %140 = vmatpush2.bf16.msra.mxu0 0
    %141 = vmatprep.subr.bf16.mxu0 0
    %142 = vmatpush2.bf16.msra.mxu0 0
    %143 = vmatprep.subr.bf16.mxu0 0
    %144 = vmatpush2.bf16.msra.mxu0 0
    %145 = vmatprep.subr.bf16.mxu0 0
    %146 = vmatpush2.bf16.msra.mxu0 0
    %147 = vmatprep.subr.bf16.mxu0 0
    %148 = vmatpush2.bf16.msra.mxu0 0
    %149 = vmatprep.mubr.bf16.mxu0 0
    %150 = vmatmul.mubr.bf16.gmra.mxu0 %v112
    %v151 = vpop.f32.mrf.mxu0
    %v152 = vadd.f32 0.0, %v151
    %v153 = vpop.f32.mrf.mxu0
    %v154 = vpop.f32.mrf.mxu0
    %v155 = vadd.f32 0.0, %v154
    %v156 = vpop.f32.mrf.mxu0
    %157 = vmatprep.mubr.bf16.mxu0 0
    %158 = vmatmul.mubr.bf16.gmra.mxu0 %v115
    %v159 = vpop.f32.mrf.mxu0
    %v160 = vadd.f32 0.0, %v159
    %v161 = vpop.f32.mrf.mxu0
    %v162 = vpop.f32.mrf.mxu0
    %v163 = vadd.f32 0.0, %v162
    %v164 = vpop.f32.mrf.mxu0
    %165 = vdwg.mxu0
    %v166 = vpack.c.bf16 %v155, %v152
    %v167 = vpack.c.bf16 %v163, %v160
    %v170 = vunpack.c.l.b16 %v166
    %v171 = vunpack.c.h.b16 %v166
    %v172 = vunpack.c.l.b16 %v167
    %v173 = vunpack.c.h.b16 %v167
    %v174 = vpack.c.b16 %v170, %v170
    %v175 = vpack.c.b16 %v171, %v171
    %v176 = vpack.c.b16 %v172, %v172
    %v177 = vpack.c.b16 %v173, %v173
    %vm182 = vcmask 781312
    %183 = vst.msk [vmem:[#allocation7] sm:$0xf] %vm182, %v174
    %184 = vst.msk [vmem:[#allocation7 + $0x4] sm:$0xf] %vm182, %v175
    %185 = vst.msk [vmem:[#allocation7 + $0x8] sm:$0xf] %vm182, %v176
    %186 = vst.msk [vmem:[#allocation7 + $0xc] sm:$0xf] %vm182, %v177
    // Predicated region
    $region22: #{tpu_custom_call.1} parent=1 // pred_check
      _
    $region23: #{tpu_custom_call.1} parent=1 // pred_check_branch
      %188 = sbr.rel (0) target = $region25
    $region24: #{tpu_custom_call.1} parent=1 // pred_region
      %s190 = ssub.s32 256, 256
      %191 = vsyncadd [#allocation4], %s190
      %s192 = sshll.u32 [#allocation7], 4
      %s193 = int_to_ptr.vmem [resolvable:$true] %s192
      %198 = dma.vmem_to_hbm [thread:$0]  %s193, 256, %s3, [#allocation4], 64, 64, 4
    $region25: #{tpu_custom_call.1} parent=1 // pred_fallthru
      _
    // Predicated region
    $region26: #{tpu_custom_call.1} parent=1 // pred_check
      _
    $region27: #{tpu_custom_call.1} parent=1 // pred_check_branch
      %200 = sbr.rel (0) target = $region29
    $region28: #{tpu_custom_call.1} parent=1 // pred_region
      %201 = dma.done [#allocation4], 256
    $region29: #{tpu_custom_call.1} parent=1 // pred_fallthru
      _
    %202 = vsyncpa [#allocation3], 1
    %203 = vsyncpa [#allocation6], 1
    %204 = vsyncpa [#allocation4], 1

</llo_original>
